<compile_context>
chip_gen: v7x
topology: tpu7x:2x2x1
jax: 0.10.0
libtpu: 0.0.40
codegen_flags: <defaults>
</compile_context>

<pallas_src>
import functools

import jax
import jax.numpy as jnp
from jax.experimental import pallas as pl
from jax.experimental.pallas import tpu as pltpu

K_IN = 784          # 28 * 28
K_PAD = 896         # 7 * 128  (zero-padded reduction dim for fc1)
H1 = 256
H2 = 64
N_OUT = 10
N_PAD = 128         # lane-dense padded output width


def _round_up(n, m):
    return ((n + m - 1) // m) * m


def mlp_kernel(x_ref, w1_ref, b1_ref, w2_ref, b2_ref, w3_ref, b3_ref, o_ref):
    # fc1 + ReLU : (TB, 896) bf16 @ (896, 256) bf16 -> f32
    h1 = jnp.dot(x_ref[...], w1_ref[...], preferred_element_type=jnp.float32)
    h1 = jnp.maximum(h1 + b1_ref[...], 0.0)
    # fc2 + ReLU : (TB, 256) @ (256, 64)
    h2 = jnp.dot(h1.astype(jnp.bfloat16), w2_ref[...],
                 preferred_element_type=jnp.float32)
    h2 = jnp.maximum(h2 + b2_ref[...], 0.0)
    # fc3        : (TB, 64) @ (64, 128)   (cols 10..127 are zero weights/bias)
    h3 = jnp.dot(h2.astype(jnp.bfloat16), w3_ref[...],
                 preferred_element_type=jnp.float32)
    o_ref[...] = (h3 + b3_ref[...]).astype(o_ref.dtype)


def net1_forward(x, params, tb=512):
    """x: (B, 1, 28, 28) float32 NCHW. Returns logits (B, 10) float32."""
    w1, b1, w2, b2, w3, b3 = params
    B = x.shape[0]

    # --- wrapper-side layout plumbing (exact-zero pads, bf16 casts) ---------
    x2d = x.reshape(B, -1).astype(jnp.bfloat16)                 # (B, 784)
    x2d = jnp.pad(x2d, ((0, 0), (0, K_PAD - K_IN)))             # (B, 896)

    # batch tile: multiple of 8 sublanes, no bigger than the (padded) batch
    tb = min(tb, _round_up(B, 8))
    Bp = _round_up(B, tb)
    if Bp != B:
        x2d = jnp.pad(x2d, ((0, Bp - B), (0, 0)))

    w1p = jnp.pad(w1, ((0, K_PAD - K_IN), (0, 0))).astype(jnp.bfloat16)  # (896,256)
    w2p = w2.astype(jnp.bfloat16)                                         # (256,64)
    w3p = jnp.pad(w3, ((0, 0), (0, N_PAD - N_OUT))).astype(jnp.bfloat16)  # (64,128)
    b1p = b1.astype(jnp.float32)                                          # (1,256)
    b2p = b2.astype(jnp.float32)                                          # (1,64)
    b3p = jnp.pad(b3, ((0, 0), (0, N_PAD - N_OUT))).astype(jnp.float32)   # (1,128)

    const = lambda shape: pl.BlockSpec(shape, lambda i: (0, 0))

    out = pl.pallas_call(
        mlp_kernel,
        out_shape=jax.ShapeDtypeStruct((Bp, N_PAD), jnp.float32),
        grid=(Bp // tb,),
        in_specs=[
            pl.BlockSpec((tb, K_PAD), lambda i: (i, 0)),   # x: tiled over batch
            const(w1p.shape), const(b1p.shape),            # weights/biases: VMEM-resident
            const(w2p.shape), const(b2p.shape),
            const(w3p.shape), const(b3p.shape),
        ],
        out_specs=pl.BlockSpec((tb, N_PAD), lambda i: (i, 0)),
        compiler_params=pltpu.CompilerParams(
            dimension_semantics=("parallel",),             # megacore split on v7x
        ),
    )(x2d, w1p, b1p, w2p, b2p, w3p, b3p)

    return out[:B, :N_OUT]


def init_params(key):
    """nn.Linear default init U(-1/sqrt(fan_in), +1/sqrt(fan_in)).
    Weights stored as (in_features, out_features); biases as (1, out_features)."""
    dims = [(K_IN, H1), (H1, H2), (H2, N_OUT)]
    params = []
    for (fan_in, fan_out) in dims:
        key, kw, kb = jax.random.split(key, 3)
        bound = 1.0 / jnp.sqrt(float(fan_in))
        w = jax.random.uniform(kw, (fan_in, fan_out), jnp.float32, -bound, bound)
        b = jax.random.uniform(kb, (1, fan_out), jnp.float32, -bound, bound)
        params.extend([w, b])
    return tuple(params)


if __name__ == "__main__":
    key = jax.random.PRNGKey(0)
    k_params, k_x = jax.random.split(key)

    params = init_params(k_params)
    B = 8
    x = jax.random.normal(k_x, (B, 1, 28, 28), jnp.float32)  # MNIST-like NCHW

    out = net1_forward(x, params)
    out = jax.block_until_ready(out)
    assert out.shape == (B, N_OUT)

    # Reference in plain JAX using the same bf16 cast (f32 accumulation).
    w1, b1, w2, b2, w3, b3 = params
    xr = x.reshape(B, -1).astype(jnp.bfloat16)
    r = jnp.dot(xr, w1.astype(jnp.bfloat16), preferred_element_type=jnp.float32)
    r = jnp.maximum(r + b1, 0.0)
    r = jnp.dot(r.astype(jnp.bfloat16), w2.astype(jnp.bfloat16),
                preferred_element_type=jnp.float32)
    r = jnp.maximum(r + b2, 0.0)
    r = jnp.dot(r.astype(jnp.bfloat16), w3.astype(jnp.bfloat16),
                preferred_element_type=jnp.float32) + b3
    assert jnp.allclose(out, r, atol=2e-2, rtol=2e-2), \
        f"max abs err {jnp.max(jnp.abs(out - r))}"

    # Sanity: bf16 result is close to the full-f32 math too.
    rf = jnp.maximum(x.reshape(B, -1) @ w1 + b1, 0.0)
    rf = jnp.maximum(rf @ w2 + b2, 0.0)
    rf = rf @ w3 + b3
    assert jnp.allclose(out, rf, atol=1e-1, rtol=1e-1)

    print("KERNEL_OK")
</pallas_src>

<mosaic_0001>
module attributes {stable_mosaic.version = 11 : i64} {
  func.func @mlp_kernel(%arg0: i32, %arg1: memref<8x896xbf16, #tpu.memory_space<vmem>>, %arg2: memref<896x256xbf16, #tpu.memory_space<vmem>>, %arg3: memref<1x256xf32, #tpu.memory_space<vmem>>, %arg4: memref<256x64xbf16, #tpu.memory_space<vmem>>, %arg5: memref<1x64xf32, #tpu.memory_space<vmem>>, %arg6: memref<64x128xbf16, #tpu.memory_space<vmem>>, %arg7: memref<1x128xf32, #tpu.memory_space<vmem>>, %arg8: memref<8x128xf32, #tpu.memory_space<vmem>>) attributes {dimension_semantics = [#tpu.dimension_semantics<parallel>], iteration_bounds = array<i64: 1>, scalar_prefetch = 0 : i64, scratch_operands = 0 : i64, tpu.core_type = #tpu.core_type<tc>, window_params = [{transform_indices = @transform_0, window_bounds = array<i64: 8, 896>}, {pipeline_mode = #tpu.pipeline_mode<synchronous>, transform_indices = @transform_1, window_bounds = array<i64: 896, 256>}, {pipeline_mode = #tpu.pipeline_mode<synchronous>, transform_indices = @transform_2, window_bounds = array<i64: 1, 256>}, {pipeline_mode = #tpu.pipeline_mode<synchronous>, transform_indices = @transform_3, window_bounds = array<i64: 256, 64>}, {pipeline_mode = #tpu.pipeline_mode<synchronous>, transform_indices = @transform_4, window_bounds = array<i64: 1, 64>}, {pipeline_mode = #tpu.pipeline_mode<synchronous>, transform_indices = @transform_5, window_bounds = array<i64: 64, 128>}, {pipeline_mode = #tpu.pipeline_mode<synchronous>, transform_indices = @transform_6, window_bounds = array<i64: 1, 128>}, {transform_indices = @transform_7, window_bounds = array<i64: 8, 128>}]} {
    %c0 = arith.constant 0 : index
    %c0_0 = arith.constant 0 : index
    %0 = vector.load %arg1[%c0, %c0_0] : memref<8x896xbf16, #tpu.memory_space<vmem>>, vector<8x896xbf16>
    %c0_1 = arith.constant 0 : index
    %c0_2 = arith.constant 0 : index
    %1 = vector.load %arg2[%c0_1, %c0_2] : memref<896x256xbf16, #tpu.memory_space<vmem>>, vector<896x256xbf16>
    %cst = arith.constant dense<0.000000e+00> : vector<8x256xf32>
    %2 = tpu.matmul %0, %1, %cst {dimension_numbers = #tpu.dot_dimension_numbers<[1], [0], [0], [1], [0, 0, 1, 1], [], []>} : vector<8x896xbf16>, vector<896x256xbf16>, vector<8x256xf32> -> vector<8x256xf32>
    %c0_3 = arith.constant 0 : index
    %c0_4 = arith.constant 0 : index
    %3 = vector.load %arg3[%c0_3, %c0_4] : memref<1x256xf32, #tpu.memory_space<vmem>>, vector<1x256xf32>
    %4 = vector.broadcast %3 : vector<1x256xf32> to vector<8x256xf32>
    %5 = arith.addf %2, %4 : vector<8x256xf32>
    %cst_5 = arith.constant 0.000000e+00 : f32
    %6 = vector.broadcast %cst_5 : f32 to vector<8x256xf32>
    %7 = arith.maximumf %5, %6 : vector<8x256xf32>
    %8 = arith.truncf %7 : vector<8x256xf32> to vector<8x256xbf16>
    %c0_6 = arith.constant 0 : index
    %c0_7 = arith.constant 0 : index
    %9 = vector.load %arg4[%c0_6, %c0_7] : memref<256x64xbf16, #tpu.memory_space<vmem>>, vector<256x64xbf16>
    %cst_8 = arith.constant dense<0.000000e+00> : vector<8x64xf32>
    %10 = tpu.matmul %8, %9, %cst_8 {dimension_numbers = #tpu.dot_dimension_numbers<[1], [0], [0], [1], [0, 0, 1, 1], [], []>} : vector<8x256xbf16>, vector<256x64xbf16>, vector<8x64xf32> -> vector<8x64xf32>
    %c0_9 = arith.constant 0 : index
    %c0_10 = arith.constant 0 : index
    %11 = vector.load %arg5[%c0_9, %c0_10] : memref<1x64xf32, #tpu.memory_space<vmem>>, vector<1x64xf32>
    %12 = vector.broadcast %11 : vector<1x64xf32> to vector<8x64xf32>
    %13 = arith.addf %10, %12 : vector<8x64xf32>
    %cst_11 = arith.constant 0.000000e+00 : f32
    %14 = vector.broadcast %cst_11 : f32 to vector<8x64xf32>
    %15 = arith.maximumf %13, %14 : vector<8x64xf32>
    %16 = arith.truncf %15 : vector<8x64xf32> to vector<8x64xbf16>
    %c0_12 = arith.constant 0 : index
    %c0_13 = arith.constant 0 : index
    %17 = vector.load %arg6[%c0_12, %c0_13] : memref<64x128xbf16, #tpu.memory_space<vmem>>, vector<64x128xbf16>
    %cst_14 = arith.constant dense<0.000000e+00> : vector<8x128xf32>
    %18 = tpu.matmul %16, %17, %cst_14 {dimension_numbers = #tpu.dot_dimension_numbers<[1], [0], [0], [1], [0, 0, 1, 1], [], []>} : vector<8x64xbf16>, vector<64x128xbf16>, vector<8x128xf32> -> vector<8x128xf32>
    %c0_15 = arith.constant 0 : index
    %c0_16 = arith.constant 0 : index
    %19 = vector.load %arg7[%c0_15, %c0_16] : memref<1x128xf32, #tpu.memory_space<vmem>>, vector<1x128xf32>
    %20 = vector.broadcast %19 : vector<1x128xf32> to vector<8x128xf32>
    %21 = arith.addf %18, %20 : vector<8x128xf32>
    %c0_17 = arith.constant 0 : index
    %c0_18 = arith.constant 0 : index
    %22 = vector.load %arg8[%c0_17, %c0_18] : memref<8x128xf32, #tpu.memory_space<vmem>>, vector<8x128xf32>
    tpu.vector_store %arg8[%c0_17, %c0_18], %21 {strides = array<i32>} : memref<8x128xf32, #tpu.memory_space<vmem>>, vector<8x128xf32>,
    return
  }
  func.func @transform_0(%arg0: i32) -> (i32, i32) {
    %c0_i32 = arith.constant 0 : i32
    %c0_i32_0 = arith.constant 0 : i32
    return %arg0, %c0_i32 : i32, i32
  }
  func.func @transform_1(%arg0: i32) -> (i32, i32) {
    %c0_i32 = arith.constant 0 : i32
    %c0_i32_0 = arith.constant 0 : i32
    %c0_i32_1 = arith.constant 0 : i32
    return %c0_i32, %c0_i32_0 : i32, i32
  }
  func.func @transform_2(%arg0: i32) -> (i32, i32) {
    %c0_i32 = arith.constant 0 : i32
    %c0_i32_0 = arith.constant 0 : i32
    %c0_i32_1 = arith.constant 0 : i32
    return %c0_i32, %c0_i32_0 : i32, i32
  }
  func.func @transform_3(%arg0: i32) -> (i32, i32) {
    %c0_i32 = arith.constant 0 : i32
    %c0_i32_0 = arith.constant 0 : i32
    %c0_i32_1 = arith.constant 0 : i32
    return %c0_i32, %c0_i32_0 : i32, i32
  }
  func.func @transform_4(%arg0: i32) -> (i32, i32) {
    %c0_i32 = arith.constant 0 : i32
    %c0_i32_0 = arith.constant 0 : i32
    %c0_i32_1 = arith.constant 0 : i32
    return %c0_i32, %c0_i32_0 : i32, i32
  }
  func.func @transform_5(%arg0: i32) -> (i32, i32) {
    %c0_i32 = arith.constant 0 : i32
    %c0_i32_0 = arith.constant 0 : i32
    %c0_i32_1 = arith.constant 0 : i32
    return %c0_i32, %c0_i32_0 : i32, i32
  }
  func.func @transform_6(%arg0: i32) -> (i32, i32) {
    %c0_i32 = arith.constant 0 : i32
    %c0_i32_0 = arith.constant 0 : i32
    %c0_i32_1 = arith.constant 0 : i32
    return %c0_i32, %c0_i32_0 : i32, i32
  }
  func.func @transform_7(%arg0: i32) -> (i32, i32) {
    %c0_i32 = arith.constant 0 : i32
    %c0_i32_0 = arith.constant 0 : i32
    return %arg0, %c0_i32 : i32, i32
  }
}

</mosaic_0001>

<llo_original>
// kernel: tpu_custom_call.1
$region0: #{tpu_custom_call.1}
  #allocation0 [shape = 'u32[]', space=smem, size = 0x4, offset = 0x4, fixed_abs, tag = 'smem constant byte address 0x4 - core index']
  #allocation1 [shape = 'u32[144,128]{1,0:T(1,128)}', space=vmem, size = 0x12000, scoped, tag = 'internal scratch']
  %s0 = inlined_call_operand.vmem [shape: bf16[8,896], index: 0, kind: input, shape index: {}]
  %s1 = inlined_call_operand.hbm [shape: bf16[896,256], index: 1, kind: input, shape index: {}]
  %s2 = inlined_call_operand.vmem [shape: f32[1,256], index: 2, kind: input, shape index: {}]
  %s3 = inlined_call_operand.vmem [shape: bf16[256,64], index: 3, kind: input, shape index: {}]
  %s4 = inlined_call_operand.vmem [shape: f32[1,64], index: 4, kind: input, shape index: {}]
  %s5 = inlined_call_operand.vmem [shape: bf16[64,128], index: 5, kind: input, shape index: {}]
  %s6 = inlined_call_operand.vmem [shape: f32[1,128], index: 6, kind: input, shape index: {}]
  %s7 = inlined_call_operand.hbm [shape: f32[8,128], index: 7, kind: output, shape index: {}]
  %s8 = sld [smem:[#allocation0]]
  $region42: #{tpu_custom_call.1} parent=0
    _
  %s10 = ssub.s32 1, %s8
  %s11 = scalar_select 0, %s10, %s8
  $region1: #{tpu_custom_call.1} parent=0
    #allocation2 [shape = 'u8[458752]{0}', space=vmem, size = 0x70000, scoped, tag = 'input window, operand 1, single buffered']
    #allocation3 [shape = 's32[1]{0}', space=sflag, size = 0x4, scoped, tag = 'scoped memory for tpu_custom_call.1']
    #allocation4 [shape = 's32[1]{0}', space=sflag, size = 0x4, scoped, tag = 'scoped memory for tpu_custom_call.1']
    #allocation5 [shape = 'u8[4096]{0}', space=vmem, size = 0x1000, scoped, tag = 'output window, operand 0, single buffered']
    %12 = vsyncpa [#allocation3], 0
    %13 = vsyncpa [#allocation4], 0
    // Predicated region
    $region2: #{tpu_custom_call.1} parent=1 // pred_check
      _
    $region3: #{tpu_custom_call.1} parent=1 // pred_check_branch
      %15 = sbr.rel (0) target = $region5
    $region4: #{tpu_custom_call.1} parent=1 // pred_region
      _
    $region5: #{tpu_custom_call.1} parent=1 // pred_fallthru
      _
    // Predicated region
    $region6: #{tpu_custom_call.1} parent=1 // pred_check
      _
    $region7: #{tpu_custom_call.1} parent=1 // pred_check_branch
      %17 = sbr.rel (0) target = $region9
    $region8: #{tpu_custom_call.1} parent=1 // pred_region
      %s19 = ssub.s32 14336, 14336
      %20 = vsyncadd [#allocation3], %s19
      %s21 = sshll.u32 [#allocation2], 4
      %s22 = int_to_ptr.vmem [resolvable:$true] %s21
      %27 = dma.hbm_to_vmem [thread:$0]  %s1, 14336, %s22, [#allocation3], 128, 128, 8
    $region9: #{tpu_custom_call.1} parent=1 // pred_fallthru
      _
    // Predicated region
    $region10: #{tpu_custom_call.1} parent=1 // pred_check
      _
    $region11: #{tpu_custom_call.1} parent=1 // pred_check_branch
      %29 = sbr.rel (0) target = $region13
    $region12: #{tpu_custom_call.1} parent=1 // pred_region
      _
    $region13: #{tpu_custom_call.1} parent=1 // pred_fallthru
      _
    // Predicated region
    $region14: #{tpu_custom_call.1} parent=1 // pred_check
      _
    $region15: #{tpu_custom_call.1} parent=1 // pred_check_branch
      %31 = sbr.rel (0) target = $region17
    $region16: #{tpu_custom_call.1} parent=1 // pred_region
      _
    $region17: #{tpu_custom_call.1} parent=1 // pred_fallthru
      _
    // Predicated region
    $region18: #{tpu_custom_call.1} parent=1 // pred_check
      _
    $region19: #{tpu_custom_call.1} parent=1 // pred_check_branch
      %33 = sbr.rel (0) target = $region21
    $region20: #{tpu_custom_call.1} parent=1 // pred_region
      _
    $region21: #{tpu_custom_call.1} parent=1 // pred_fallthru
      _
    // Predicated region
    $region22: #{tpu_custom_call.1} parent=1 // pred_check
      _
    $region23: #{tpu_custom_call.1} parent=1 // pred_check_branch
      %35 = sbr.rel (0) target = $region25
    $region24: #{tpu_custom_call.1} parent=1 // pred_region
      _
    $region25: #{tpu_custom_call.1} parent=1 // pred_fallthru
      _
    // Predicated region
    $region26: #{tpu_custom_call.1} parent=1 // pred_check
      _
    $region27: #{tpu_custom_call.1} parent=1 // pred_check_branch
      %37 = sbr.rel (0) target = $region29
    $region28: #{tpu_custom_call.1} parent=1 // pred_region
      _
    $region29: #{tpu_custom_call.1} parent=1 // pred_fallthru
      _
    // Predicated region
    $region30: #{tpu_custom_call.1} parent=1 // pred_check
      _
    $region31: #{tpu_custom_call.1} parent=1 // pred_check_branch
      %39 = sbr.rel (0) target = $region33
    $region32: #{tpu_custom_call.1} parent=1 // pred_region
      %40 = dma.done [#allocation3], 14336
    $region33: #{tpu_custom_call.1} parent=1 // pred_fallthru
      _
    %v42 = vld [vmem:[%s0] sm:$0xff]
    %v43 = vld [vmem:[%s0 + $0x8] sm:$0xff]
    %v44 = vld [vmem:[%s0 + $0x10] sm:$0xff]
    %v45 = vld [vmem:[%s0 + $0x18] sm:$0xf]
    %v46 = vld [vmem:[#allocation2] sm:$0xff]
    %v47 = vld [vmem:[#allocation2 + $0x8] sm:$0xff]
    %v48 = vld [vmem:[#allocation2 + $0x10] sm:$0xff]
    %v49 = vld [vmem:[#allocation2 + $0x18] sm:$0xff]
    %v50 = vld [vmem:[#allocation2 + $0x20] sm:$0xff]
    %v51 = vld [vmem:[#allocation2 + $0x28] sm:$0xff]
    %v52 = vld [vmem:[#allocation2 + $0x30] sm:$0xff]
    %v53 = vld [vmem:[#allocation2 + $0x38] sm:$0xff]
    %v54 = vld [vmem:[#allocation2 + $0x40] sm:$0xff]
    %v55 = vld [vmem:[#allocation2 + $0x48] sm:$0xff]
    %v56 = vld [vmem:[#allocation2 + $0x50] sm:$0xff]
    %v57 = vld [vmem:[#allocation2 + $0x58] sm:$0xff]
    %v58 = vld [vmem:[#allocation2 + $0x60] sm:$0xff]
    %v59 = vld [vmem:[#allocation2 + $0x68] sm:$0xff]
    %v60 = vld [vmem:[#allocation2 + $0x70] sm:$0xff]
    %v61 = vld [vmem:[#allocation2 + $0x78] sm:$0xff]
    %v62 = vld [vmem:[#allocation2 + $0x80] sm:$0xff]
    %v63 = vld [vmem:[#allocation2 + $0x88] sm:$0xff]
    %v64 = vld [vmem:[#allocation2 + $0x90] sm:$0xff]
    %v65 = vld [vmem:[#allocation2 + $0x98] sm:$0xff]
    %v66 = vld [vmem:[#allocation2 + $0xa0] sm:$0xff]
    %v67 = vld [vmem:[#allocation2 + $0xa8] sm:$0xff]
    %v68 = vld [vmem:[#allocation2 + $0xb0] sm:$0xff]
    %v69 = vld [vmem:[#allocation2 + $0xb8] sm:$0xff]
    %v70 = vld [vmem:[#allocation2 + $0xc0] sm:$0xff]
    %v71 = vld [vmem:[#allocation2 + $0xc8] sm:$0xff]
    %v72 = vld [vmem:[#allocation2 + $0xd0] sm:$0xff]
    %v73 = vld [vmem:[#allocation2 + $0xd8] sm:$0xff]
    %v74 = vld [vmem:[#allocation2 + $0xe0] sm:$0xff]
    %v75 = vld [vmem:[#allocation2 + $0xe8] sm:$0xff]
    %v76 = vld [vmem:[#allocation2 + $0xf0] sm:$0xff]
    %v77 = vld [vmem:[#allocation2 + $0xf8] sm:$0xff]
    %v78 = vld [vmem:[#allocation2 + $0x100] sm:$0xff]
    %v79 = vld [vmem:[#allocation2 + $0x108] sm:$0xff]
    %v80 = vld [vmem:[#allocation2 + $0x110] sm:$0xff]
    %v81 = vld [vmem:[#allocation2 + $0x118] sm:$0xff]
    %v82 = vld [vmem:[#allocation2 + $0x120] sm:$0xff]
    %v83 = vld [vmem:[#allocation2 + $0x128] sm:$0xff]
    %v84 = vld [vmem:[#allocation2 + $0x130] sm:$0xff]
    %v85 = vld [vmem:[#allocation2 + $0x138] sm:$0xff]
    %v86 = vld [vmem:[#allocation2 + $0x140] sm:$0xff]
    %v87 = vld [vmem:[#allocation2 + $0x148] sm:$0xff]
    %v88 = vld [vmem:[#allocation2 + $0x150] sm:$0xff]
    %v89 = vld [vmem:[#allocation2 + $0x158] sm:$0xff]
    %v90 = vld [vmem:[#allocation2 + $0x160] sm:$0xff]
    %v91 = vld [vmem:[#allocation2 + $0x168] sm:$0xff]
    %v92 = vld [vmem:[#allocation2 + $0x170] sm:$0xff]
    %v93 = vld [vmem:[#allocation2 + $0x178] sm:$0xff]
    %v94 = vld [vmem:[#allocation2 + $0x180] sm:$0xff]
    %v95 = vld [vmem:[#allocation2 + $0x188] sm:$0xff]
    %v96 = vld [vmem:[#allocation2 + $0x190] sm:$0xff]
    %v97 = vld [vmem:[#allocation2 + $0x198] sm:$0xff]
    %v98 = vld [vmem:[#allocation2 + $0x1a0] sm:$0xff]
    %v99 = vld [vmem:[#allocation2 + $0x1a8] sm:$0xff]
    %v100 = vld [vmem:[#allocation2 + $0x1b0] sm:$0xff]
    %v101 = vld [vmem:[#allocation2 + $0x1b8] sm:$0xff]
    %v102 = vld [vmem:[#allocation2 + $0x1c0] sm:$0xff]
    %v103 = vld [vmem:[#allocation2 + $0x1c8] sm:$0xff]
    %v104 = vld [vmem:[#allocation2 + $0x1d0] sm:$0xff]
    %v105 = vld [vmem:[#allocation2 + $0x1d8] sm:$0xff]
    %v106 = vld [vmem:[#allocation2 + $0x1e0] sm:$0xff]
    %v107 = vld [vmem:[#allocation2 + $0x1e8] sm:$0xff]
    %v108 = vld [vmem:[#allocation2 + $0x1f0] sm:$0xff]
    %v109 = vld [vmem:[#allocation2 + $0x1f8] sm:$0xff]
    %v110 = vld [vmem:[#allocation2 + $0x200] sm:$0xff]
    %v111 = vld [vmem:[#allocation2 + $0x208] sm:$0xff]
    %v112 = vld [vmem:[#allocation2 + $0x210] sm:$0xff]
    %v113 = vld [vmem:[#allocation2 + $0x218] sm:$0xff]
    %v114 = vld [vmem:[#allocation2 + $0x220] sm:$0xff]
    %v115 = vld [vmem:[#allocation2 + $0x228] sm:$0xff]
    %v116 = vld [vmem:[#allocation2 + $0x230] sm:$0xff]
    %v117 = vld [vmem:[#allocation2 + $0x238] sm:$0xff]
    %v118 = vld [vmem:[#allocation2 + $0x240] sm:$0xff]
    %v119 = vld [vmem:[#allocation2 + $0x248] sm:$0xff]
    %v120 = vld [vmem:[#allocation2 + $0x250] sm:$0xff]
    %v121 = vld [vmem:[#allocation2 + $0x258] sm:$0xff]
    %v122 = vld [vmem:[#allocation2 + $0x260] sm:$0xff]
    %v123 = vld [vmem:[#allocation2 + $0x268] sm:$0xff]
    %v124 = vld [vmem:[#allocation2 + $0x270] sm:$0xff]
    %v125 = vld [vmem:[#allocation2 + $0x278] sm:$0xff]
    %v126 = vld [vmem:[#allocation2 + $0x280] sm:$0xff]
    %v127 = vld [vmem:[#allocation2 + $0x288] sm:$0xff]
    %v128 = vld [vmem:[#allocation2 + $0x290] sm:$0xff]
    %v129 = vld [vmem:[#allocation2 + $0x298] sm:$0xff]
    %v130 = vld [vmem:[#allocation2 + $0x2a0] sm:$0xff]
    %v131 = vld [vmem:[#allocation2 + $0x2a8] sm:$0xff]
    %v132 = vld [vmem:[#allocation2 + $0x2b0] sm:$0xff]
    %v133 = vld [vmem:[#allocation2 + $0x2b8] sm:$0xff]
    %v134 = vld [vmem:[#allocation2 + $0x2c0] sm:$0xff]
    %v135 = vld [vmem:[#allocation2 + $0x2c8] sm:$0xff]
    %v136 = vld [vmem:[#allocation2 + $0x2d0] sm:$0xff]
    %v137 = vld [vmem:[#allocation2 + $0x2d8] sm:$0xff]
    %v138 = vld [vmem:[#allocation2 + $0x2e0] sm:$0xff]
    %v139 = vld [vmem:[#allocation2 + $0x2e8] sm:$0xff]
    %v140 = vld [vmem:[#allocation2 + $0x2f0] sm:$0xff]
    %v141 = vld [vmem:[#allocation2 + $0x2f8] sm:$0xff]
    %v142 = vld [vmem:[#allocation2 + $0x300] sm:$0xff]
    %v143 = vld [vmem:[#allocation2 + $0x308] sm:$0xff]
    %v144 = vld [vmem:[#allocation2 + $0x310] sm:$0xff]
    %v145 = vld [vmem:[#allocation2 + $0x318] sm:$0xff]
    %v146 = vld [vmem:[#allocation2 + $0x320] sm:$0xff]
    %v147 = vld [vmem:[#allocation2 + $0x328] sm:$0xff]
    %v148 = vld [vmem:[#allocation2 + $0x330] sm:$0xff]
    %v149 = vld [vmem:[#allocation2 + $0x338] sm:$0xff]
    %v150 = vld [vmem:[#allocation2 + $0x340] sm:$0xff]
    %v151 = vld [vmem:[#allocation2 + $0x348] sm:$0xff]
    %v152 = vld [vmem:[#allocation2 + $0x350] sm:$0xff]
    %v153 = vld [vmem:[#allocation2 + $0x358] sm:$0xff]
    %v154 = vld [vmem:[#allocation2 + $0x360] sm:$0xff]
    %v155 = vld [vmem:[#allocation2 + $0x368] sm:$0xff]
    %v156 = vld [vmem:[#allocation2 + $0x370] sm:$0xff]
    %v157 = vld [vmem:[#allocation2 + $0x378] sm:$0xff]
    %v158 = vld [vmem:[%s2] sm:$0x3]
    %v160 = vlaneseq
    %v161 = vshrl.u32 %v160, 7
    %v162 = vsub.s32 0, %v161
    %v163 = vrot.slane %v158, %v162
    %v164 = vlaneseq
    %v165 = vshrl.u32 %v164, 7
    %v166 = vsub.s32 1, %v165
    %v167 = vrot.slane %v158, %v166
    %v174 = vunpack.c.l.b16 %v42
    %v175 = vunpack.c.h.b16 %v42
    %v176 = vunpack.c.l.b16 %v43
    %v177 = vunpack.c.h.b16 %v43
    %v178 = vunpack.c.l.b16 %v44
    %v179 = vunpack.c.h.b16 %v44
    %v180 = vunpack.c.l.b16 %v45
    %v181 = vpack.c.b16 %v174, %v174
    %v182 = vpack.c.b16 %v175, %v175
    %v183 = vpack.c.b16 %v176, %v176
    %v184 = vpack.c.b16 %v177, %v177
    %v185 = vpack.c.b16 %v178, %v178
    %v186 = vpack.c.b16 %v179, %v179
    %v187 = vpack.c.b16 %v180, %v180
    %v307 = vunpack.c.l.b16 %v46
    %v308 = vunpack.c.h.b16 %v46
    %v309 = vunpack.c.l.b16 %v47
    %v310 = vunpack.c.h.b16 %v47
    %v311 = vunpack.c.l.b16 %v48
    %v312 = vunpack.c.h.b16 %v48
    %v313 = vunpack.c.l.b16 %v49
    %v314 = vunpack.c.h.b16 %v49
    %v315 = vunpack.c.l.b16 %v50
    %v316 = vunpack.c.h.b16 %v50
    %v317 = vunpack.c.l.b16 %v51
    %v318 = vunpack.c.h.b16 %v51
    %v319 = vunpack.c.l.b16 %v52
    %v320 = vunpack.c.h.b16 %v52
    %v321 = vunpack.c.l.b16 %v53
    %v322 = vunpack.c.h.b16 %v53
    %v323 = vunpack.c.l.b16 %v54
    %v324 = vunpack.c.h.b16 %v54
    %v325 = vunpack.c.l.b16 %v55
    %v326 = vunpack.c.h.b16 %v55
    %v327 = vunpack.c.l.b16 %v56
    %v328 = vunpack.c.h.b16 %v56
    %v329 = vunpack.c.l.b16 %v57
    %v330 = vunpack.c.h.b16 %v57
    %v331 = vunpack.c.l.b16 %v58
    %v332 = vunpack.c.h.b16 %v58
    %v333 = vunpack.c.l.b16 %v59
    %v334 = vunpack.c.h.b16 %v59
    %v335 = vunpack.c.l.b16 %v60
    %v336 = vunpack.c.h.b16 %v60
    %v337 = vunpack.c.l.b16 %v61
    %v338 = vunpack.c.h.b16 %v61
    %v339 = vunpack.c.l.b16 %v62
    %v340 = vunpack.c.h.b16 %v62
    %v341 = vunpack.c.l.b16 %v63
    %v342 = vunpack.c.h.b16 %v63
    %v343 = vunpack.c.l.b16 %v64
    %v344 = vunpack.c.h.b16 %v64
    %v345 = vunpack.c.l.b16 %v65
    %v346 = vunpack.c.h.b16 %v65
    %v347 = vunpack.c.l.b16 %v66
    %v348 = vunpack.c.h.b16 %v66
    %v349 = vunpack.c.l.b16 %v67
    %v350 = vunpack.c.h.b16 %v67
    %v351 = vunpack.c.l.b16 %v68
    %v352 = vunpack.c.h.b16 %v68
    %v353 = vunpack.c.l.b16 %v69
    %v354 = vunpack.c.h.b16 %v69
    %v355 = vunpack.c.l.b16 %v70
    %v356 = vunpack.c.h.b16 %v70
    %v357 = vunpack.c.l.b16 %v71
    %v358 = vunpack.c.h.b16 %v71
    %v359 = vunpack.c.l.b16 %v72
    %v360 = vunpack.c.h.b16 %v72
    %v361 = vunpack.c.l.b16 %v73
    %v362 = vunpack.c.h.b16 %v73
    %v363 = vunpack.c.l.b16 %v74
    %v364 = vunpack.c.h.b16 %v74
    %v365 = vunpack.c.l.b16 %v75
    %v366 = vunpack.c.h.b16 %v75
    %v367 = vunpack.c.l.b16 %v76
    %v368 = vunpack.c.h.b16 %v76
    %v369 = vunpack.c.l.b16 %v77
    %v370 = vunpack.c.h.b16 %v77
    %v371 = vunpack.c.l.b16 %v78
    %v372 = vunpack.c.h.b16 %v78
    %v373 = vunpack.c.l.b16 %v79
    %v374 = vunpack.c.h.b16 %v79
    %v375 = vunpack.c.l.b16 %v80
    %v376 = vunpack.c.h.b16 %v80
    %v377 = vunpack.c.l.b16 %v81
    %v378 = vunpack.c.h.b16 %v81
    %v379 = vunpack.c.l.b16 %v82
    %v380 = vunpack.c.h.b16 %v82
    %v381 = vunpack.c.l.b16 %v83
    %v382 = vunpack.c.h.b16 %v83
    %v383 = vunpack.c.l.b16 %v84
    %v384 = vunpack.c.h.b16 %v84
    %v385 = vunpack.c.l.b16 %v85
    %v386 = vunpack.c.h.b16 %v85
    %v387 = vunpack.c.l.b16 %v86
    %v388 = vunpack.c.h.b16 %v86
    %v389 = vunpack.c.l.b16 %v87
    %v390 = vunpack.c.h.b16 %v87
    %v391 = vunpack.c.l.b16 %v88
    %v392 = vunpack.c.h.b16 %v88
    %v393 = vunpack.c.l.b16 %v89
    %v394 = vunpack.c.h.b16 %v89
    %v395 = vunpack.c.l.b16 %v90
    %v396 = vunpack.c.h.b16 %v90
    %v397 = vunpack.c.l.b16 %v91
    %v398 = vunpack.c.h.b16 %v91
    %v399 = vunpack.c.l.b16 %v92
    %v400 = vunpack.c.h.b16 %v92
    %v401 = vunpack.c.l.b16 %v93
    %v402 = vunpack.c.h.b16 %v93
    %v403 = vunpack.c.l.b16 %v94
    %v404 = vunpack.c.h.b16 %v94
    %v405 = vunpack.c.l.b16 %v95
    %v406 = vunpack.c.h.b16 %v95
    %v407 = vunpack.c.l.b16 %v96
    %v408 = vunpack.c.h.b16 %v96
    %v409 = vunpack.c.l.b16 %v97
    %v410 = vunpack.c.h.b16 %v97
    %v411 = vunpack.c.l.b16 %v98
    %v412 = vunpack.c.h.b16 %v98
    %v413 = vunpack.c.l.b16 %v99
    %v414 = vunpack.c.h.b16 %v99
    %v415 = vunpack.c.l.b16 %v100
    %v416 = vunpack.c.h.b16 %v100
    %v417 = vunpack.c.l.b16 %v101
    %v418 = vunpack.c.h.b16 %v101
    %v419 = vunpack.c.l.b16 %v102
    %v420 = vunpack.c.h.b16 %v102
    %v421 = vunpack.c.l.b16 %v103
    %v422 = vunpack.c.h.b16 %v103
    %v423 = vunpack.c.l.b16 %v104
    %v424 = vunpack.c.h.b16 %v104
    %v425 = vunpack.c.l.b16 %v105
    %v426 = vunpack.c.h.b16 %v105
    %v427 = vunpack.c.l.b16 %v106
    %v428 = vunpack.c.h.b16 %v106
    %v429 = vunpack.c.l.b16 %v107
    %v430 = vunpack.c.h.b16 %v107
    %v431 = vunpack.c.l.b16 %v108
    %v432 = vunpack.c.h.b16 %v108
    %v433 = vunpack.c.l.b16 %v109
    %v434 = vunpack.c.h.b16 %v109
    %v435 = vunpack.c.l.b16 %v110
    %v436 = vunpack.c.h.b16 %v110
    %v437 = vunpack.c.l.b16 %v111
    %v438 = vunpack.c.h.b16 %v111
    %v439 = vunpack.c.l.b16 %v112
    %v440 = vunpack.c.h.b16 %v112
    %v441 = vunpack.c.l.b16 %v113
    %v442 = vunpack.c.h.b16 %v113
    %v443 = vunpack.c.l.b16 %v114
    %v444 = vunpack.c.h.b16 %v114
    %v445 = vunpack.c.l.b16 %v115
    %v446 = vunpack.c.h.b16 %v115
    %v447 = vunpack.c.l.b16 %v116
    %v448 = vunpack.c.h.b16 %v116
    %v449 = vunpack.c.l.b16 %v117
    %v450 = vunpack.c.h.b16 %v117
    %v451 = vunpack.c.l.b16 %v118
    %v452 = vunpack.c.h.b16 %v118
    %v453 = vunpack.c.l.b16 %v119
    %v454 = vunpack.c.h.b16 %v119
    %v455 = vunpack.c.l.b16 %v120
    %v456 = vunpack.c.h.b16 %v120
    %v457 = vunpack.c.l.b16 %v121
    %v458 = vunpack.c.h.b16 %v121
    %v459 = vunpack.c.l.b16 %v122
    %v460 = vunpack.c.h.b16 %v122
    %v461 = vunpack.c.l.b16 %v123
    %v462 = vunpack.c.h.b16 %v123
    %v463 = vunpack.c.l.b16 %v124
    %v464 = vunpack.c.h.b16 %v124
    %v465 = vunpack.c.l.b16 %v125
    %v466 = vunpack.c.h.b16 %v125
    %v467 = vunpack.c.l.b16 %v126
    %v468 = vunpack.c.h.b16 %v126
    %v469 = vunpack.c.l.b16 %v127
    %v470 = vunpack.c.h.b16 %v127
    %v471 = vunpack.c.l.b16 %v128
    %v472 = vunpack.c.h.b16 %v128
    %v473 = vunpack.c.l.b16 %v129
    %v474 = vunpack.c.h.b16 %v129
    %v475 = vunpack.c.l.b16 %v130
    %v476 = vunpack.c.h.b16 %v130
    %v477 = vunpack.c.l.b16 %v131
    %v478 = vunpack.c.h.b16 %v131
    %v479 = vunpack.c.l.b16 %v132
    %v480 = vunpack.c.h.b16 %v132
    %v481 = vunpack.c.l.b16 %v133
    %v482 = vunpack.c.h.b16 %v133
    %v483 = vunpack.c.l.b16 %v134
    %v484 = vunpack.c.h.b16 %v134
    %v485 = vunpack.c.l.b16 %v135
    %v486 = vunpack.c.h.b16 %v135
    %v487 = vunpack.c.l.b16 %v136
    %v488 = vunpack.c.h.b16 %v136
    %v489 = vunpack.c.l.b16 %v137
    %v490 = vunpack.c.h.b16 %v137
    %v491 = vunpack.c.l.b16 %v138
    %v492 = vunpack.c.h.b16 %v138
    %v493 = vunpack.c.l.b16 %v139
    %v494 = vunpack.c.h.b16 %v139
    %v495 = vunpack.c.l.b16 %v140
    %v496 = vunpack.c.h.b16 %v140
    %v497 = vunpack.c.l.b16 %v141
    %v498 = vunpack.c.h.b16 %v141
    %v499 = vunpack.c.l.b16 %v142
    %v500 = vunpack.c.h.b16 %v142
    %v501 = vunpack.c.l.b16 %v143
    %v502 = vunpack.c.h.b16 %v143
    %v503 = vunpack.c.l.b16 %v144
    %v504 = vunpack.c.h.b16 %v144
    %v505 = vunpack.c.l.b16 %v145
    %v506 = vunpack.c.h.b16 %v145
    %v507 = vunpack.c.l.b16 %v146
    %v508 = vunpack.c.h.b16 %v146
    %v509 = vunpack.c.l.b16 %v147
    %v510 = vunpack.c.h.b16 %v147
    %v511 = vunpack.c.l.b16 %v148
    %v512 = vunpack.c.h.b16 %v148
    %v513 = vunpack.c.l.b16 %v149
    %v514 = vunpack.c.h.b16 %v149
    %v515 = vunpack.c.l.b16 %v150
    %v516 = vunpack.c.h.b16 %v150
    %v517 = vunpack.c.l.b16 %v151
    %v518 = vunpack.c.h.b16 %v151
    %v519 = vunpack.c.l.b16 %v152
    %v520 = vunpack.c.h.b16 %v152
    %v521 = vunpack.c.l.b16 %v153
    %v522 = vunpack.c.h.b16 %v153
    %v523 = vunpack.c.l.b16 %v154
    %v524 = vunpack.c.h.b16 %v154
    %v525 = vunpack.c.l.b16 %v155
    %v526 = vunpack.c.h.b16 %v155
    %v527 = vunpack.c.l.b16 %v156
    %v528 = vunpack.c.h.b16 %v156
    %v529 = vunpack.c.l.b16 %v157
    %v530 = vunpack.c.h.b16 %v157
    %v531 = vpack.c.b16 %v309, %v307
    %v532 = vpack.c.b16 %v310, %v308
    %v533 = vpack.c.b16 %v313, %v311
    %v534 = vpack.c.b16 %v314, %v312
    %v535 = vpack.c.b16 %v317, %v315
    %v536 = vpack.c.b16 %v318, %v316
    %v537 = vpack.c.b16 %v321, %v319
    %v538 = vpack.c.b16 %v322, %v320
    %v539 = vpack.c.b16 %v325, %v323
    %v540 = vpack.c.b16 %v326, %v324
    %v541 = vpack.c.b16 %v329, %v327
    %v542 = vpack.c.b16 %v330, %v328
    %v543 = vpack.c.b16 %v333, %v331
    %v544 = vpack.c.b16 %v334, %v332
    %v545 = vpack.c.b16 %v337, %v335
    %v546 = vpack.c.b16 %v338, %v336
    %v547 = vpack.c.b16 %v341, %v339
    %v548 = vpack.c.b16 %v342, %v340
    %v549 = vpack.c.b16 %v345, %v343
    %v550 = vpack.c.b16 %v346, %v344
    %v551 = vpack.c.b16 %v349, %v347
    %v552 = vpack.c.b16 %v350, %v348
    %v553 = vpack.c.b16 %v353, %v351
    %v554 = vpack.c.b16 %v354, %v352
    %v555 = vpack.c.b16 %v357, %v355
    %v556 = vpack.c.b16 %v358, %v356
    %v557 = vpack.c.b16 %v361, %v359
    %v558 = vpack.c.b16 %v362, %v360
    %v559 = vpack.c.b16 %v365, %v363
    %v560 = vpack.c.b16 %v366, %v364
    %v561 = vpack.c.b16 %v369, %v367
    %v562 = vpack.c.b16 %v370, %v368
    %v563 = vpack.c.b16 %v373, %v371
    %v564 = vpack.c.b16 %v374, %v372
    %v565 = vpack.c.b16 %v377, %v375
    %v566 = vpack.c.b16 %v378, %v376
    %v567 = vpack.c.b16 %v381, %v379
    %v568 = vpack.c.b16 %v382, %v380
    %v569 = vpack.c.b16 %v385, %v383
    %v570 = vpack.c.b16 %v386, %v384
    %v571 = vpack.c.b16 %v389, %v387
    %v572 = vpack.c.b16 %v390, %v388
    %v573 = vpack.c.b16 %v393, %v391
    %v574 = vpack.c.b16 %v394, %v392
    %v575 = vpack.c.b16 %v397, %v395
    %v576 = vpack.c.b16 %v398, %v396
    %v577 = vpack.c.b16 %v401, %v399
    %v578 = vpack.c.b16 %v402, %v400
    %v579 = vpack.c.b16 %v405, %v403
    %v580 = vpack.c.b16 %v406, %v404
    %v581 = vpack.c.b16 %v409, %v407
    %v582 = vpack.c.b16 %v410, %v408
    %v583 = vpack.c.b16 %v413, %v411
    %v584 = vpack.c.b16 %v414, %v412
    %v585 = vpack.c.b16 %v417, %v415
    %v586 = vpack.c.b16 %v418, %v416
    %v587 = vpack.c.b16 %v421, %v419
    %v588 = vpack.c.b16 %v422, %v420
    %v589 = vpack.c.b16 %v425, %v423
    %v590 = vpack.c.b16 %v426, %v424
    %v591 = vpack.c.b16 %v429, %v427
    %v592 = vpack.c.b16 %v430, %v428
    %v593 = vpack.c.b16 %v433, %v431
    %v594 = vpack.c.b16 %v434, %v432
    %v595 = vpack.c.b16 %v437, %v435
    %v596 = vpack.c.b16 %v438, %v436
    %v597 = vpack.c.b16 %v441, %v439
    %v598 = vpack.c.b16 %v442, %v440
    %v599 = vpack.c.b16 %v445, %v443
    %v600 = vpack.c.b16 %v446, %v444
    %v601 = vpack.c.b16 %v449, %v447
    %v602 = vpack.c.b16 %v450, %v448
    %v603 = vpack.c.b16 %v453, %v451
    %v604 = vpack.c.b16 %v454, %v452
    %v605 = vpack.c.b16 %v457, %v455
    %v606 = vpack.c.b16 %v458, %v456
    %v607 = vpack.c.b16 %v461, %v459
    %v608 = vpack.c.b16 %v462, %v460
    %v609 = vpack.c.b16 %v465, %v463
    %v610 = vpack.c.b16 %v466, %v464
    %v611 = vpack.c.b16 %v469, %v467
    %v612 = vpack.c.b16 %v470, %v468
    %v613 = vpack.c.b16 %v473, %v471
    %v614 = vpack.c.b16 %v474, %v472
    %v615 = vpack.c.b16 %v477, %v475
    %v616 = vpack.c.b16 %v478, %v476
    %v617 = vpack.c.b16 %v481, %v479
    %v618 = vpack.c.b16 %v482, %v480
    %v619 = vpack.c.b16 %v485, %v483
    %v620 = vpack.c.b16 %v486, %v484
    %v621 = vpack.c.b16 %v489, %v487
    %v622 = vpack.c.b16 %v490, %v488
    %v623 = vpack.c.b16 %v493, %v491
    %v624 = vpack.c.b16 %v494, %v492
    %v625 = vpack.c.b16 %v497, %v495
    %v626 = vpack.c.b16 %v498, %v496
    %v627 = vpack.c.b16 %v501, %v499
    %v628 = vpack.c.b16 %v502, %v500
    %v629 = vpack.c.b16 %v505, %v503
    %v630 = vpack.c.b16 %v506, %v504
    %v631 = vpack.c.b16 %v509, %v507
    %v632 = vpack.c.b16 %v510, %v508
    %v633 = vpack.c.b16 %v513, %v511
    %v634 = vpack.c.b16 %v514, %v512
    %v635 = vpack.c.b16 %v517, %v515
    %v636 = vpack.c.b16 %v518, %v516
    %v637 = vpack.c.b16 %v521, %v519
    %v638 = vpack.c.b16 %v522, %v520
    %v639 = vpack.c.b16 %v525, %v523
    %v640 = vpack.c.b16 %v526, %v524
    %v641 = vpack.c.b16 %v529, %v527
    %v642 = vpack.c.b16 %v530, %v528
    %755 = vmatprep.subr.bf16.mxu0 %v532
    %756 = vmatpush1.bf16.msra.mxu0 %v531
    %757 = vmatprep.subr.bf16.mxu0 %v534
    %758 = vmatpush1.bf16.msra.mxu0 %v533
    %759 = vmatprep.subr.bf16.mxu0 %v536
    %760 = vmatpush1.bf16.msra.mxu0 %v535
    %761 = vmatprep.subr.bf16.mxu0 %v538
    %762 = vmatpush1.bf16.msra.mxu0 %v537
    %763 = vmatprep.subr.bf16.mxu0 %v540
    %764 = vmatpush1.bf16.msra.mxu0 %v539
    %765 = vmatprep.subr.bf16.mxu0 %v542
    %766 = vmatpush1.bf16.msra.mxu0 %v541
    %767 = vmatprep.subr.bf16.mxu0 %v544
    %768 = vmatpush1.bf16.msra.mxu0 %v543
    %769 = vmatprep.subr.bf16.mxu0 %v546
    %770 = vmatpush1.bf16.msra.mxu0 %v545
    %771 = vmatprep.subr.bf16.mxu0 %v548
    %772 = vmatpush1.bf16.msra.mxu0 %v547
    %773 = vmatprep.subr.bf16.mxu0 %v550
    %774 = vmatpush1.bf16.msra.mxu0 %v549
    %775 = vmatprep.subr.bf16.mxu0 %v552
    %776 = vmatpush1.bf16.msra.mxu0 %v551
    %777 = vmatprep.subr.bf16.mxu0 %v554
    %778 = vmatpush1.bf16.msra.mxu0 %v553
    %779 = vmatprep.subr.bf16.mxu0 %v556
    %780 = vmatpush1.bf16.msra.mxu0 %v555
    %781 = vmatprep.subr.bf16.mxu0 %v558
    %782 = vmatpush1.bf16.msra.mxu0 %v557
    %783 = vmatprep.subr.bf16.mxu0 %v560
    %784 = vmatpush1.bf16.msra.mxu0 %v559
    %785 = vmatprep.subr.bf16.mxu0 %v562
    %786 = vmatpush1.bf16.msra.mxu0 %v561
    %787 = vmatprep.mubr.bf16.mxu0 %v182
    %788 = vmatmul.mubr.bf16.gmra.mrb[0].mxu0 %v181
    %v789 = vpop.f32.mrb[0].mxu0
    %v790 = vadd.f32 %v163, %v789
    %v791 = vpop.f32.mrb[0].mxu0
    %v792 = vadd.f32 %v167, %v791
    %v793 = vpop.f32.mrb[0].mxu0
    %v794 = vpop.f32.mrb[0].mxu0
    %795 = vdwg.mxu0
    %796 = vmatprep.subr.bf16.mxu0 %v564
    %797 = vmatpush1.bf16.msra.mxu0 %v563
    %798 = vmatprep.subr.bf16.mxu0 %v566
    %799 = vmatpush1.bf16.msra.mxu0 %v565
    %800 = vmatprep.subr.bf16.mxu0 %v568
    %801 = vmatpush1.bf16.msra.mxu0 %v567
    %802 = vmatprep.subr.bf16.mxu0 %v570
    %803 = vmatpush1.bf16.msra.mxu0 %v569
    %804 = vmatprep.subr.bf16.mxu0 %v572
    %805 = vmatpush1.bf16.msra.mxu0 %v571
    %806 = vmatprep.subr.bf16.mxu0 %v574
    %807 = vmatpush1.bf16.msra.mxu0 %v573
    %808 = vmatprep.subr.bf16.mxu0 %v576
    %809 = vmatpush1.bf16.msra.mxu0 %v575
    %810 = vmatprep.subr.bf16.mxu0 %v578
    %811 = vmatpush1.bf16.msra.mxu0 %v577
    %812 = vmatprep.subr.bf16.mxu0 %v580
    %813 = vmatpush1.bf16.msra.mxu0 %v579
    %814 = vmatprep.subr.bf16.mxu0 %v582
    %815 = vmatpush1.bf16.msra.mxu0 %v581
    %816 = vmatprep.subr.bf16.mxu0 %v584
    %817 = vmatpush1.bf16.msra.mxu0 %v583
    %818 = vmatprep.subr.bf16.mxu0 %v586
    %819 = vmatpush1.bf16.msra.mxu0 %v585
    %820 = vmatprep.subr.bf16.mxu0 %v588
    %821 = vmatpush1.bf16.msra.mxu0 %v587
    %822 = vmatprep.subr.bf16.mxu0 %v590
    %823 = vmatpush1.bf16.msra.mxu0 %v589
    %824 = vmatprep.subr.bf16.mxu0 %v592
    %825 = vmatpush1.bf16.msra.mxu0 %v591
    %826 = vmatprep.subr.bf16.mxu0 %v594
    %827 = vmatpush1.bf16.msra.mxu0 %v593
    %828 = vmatprep.mubr.bf16.mxu0 %v184
    %829 = vmatmul.mubr.bf16.gmra.mrb[0].mxu0 %v183
    %v830 = vpop.f32.mrb[0].mxu0
    %v831 = vadd.f32 %v790, %v830
    %v832 = vpop.f32.mrb[0].mxu0
    %v833 = vadd.f32 %v792, %v832
    %v834 = vpop.f32.mrb[0].mxu0
    %v835 = vpop.f32.mrb[0].mxu0
    %836 = vdwg.mxu0
    %837 = vmatprep.subr.bf16.mxu0 %v596
    %838 = vmatpush1.bf16.msra.mxu0 %v595
    %839 = vmatprep.subr.bf16.mxu0 %v598
    %840 = vmatpush1.bf16.msra.mxu0 %v597
    %841 = vmatprep.subr.bf16.mxu0 %v600
    %842 = vmatpush1.bf16.msra.mxu0 %v599
    %843 = vmatprep.subr.bf16.mxu0 %v602
    %844 = vmatpush1.bf16.msra.mxu0 %v601
    %845 = vmatprep.subr.bf16.mxu0 %v604
    %846 = vmatpush1.bf16.msra.mxu0 %v603
    %847 = vmatprep.subr.bf16.mxu0 %v606
    %848 = vmatpush1.bf16.msra.mxu0 %v605
    %849 = vmatprep.subr.bf16.mxu0 %v608
    %850 = vmatpush1.bf16.msra.mxu0 %v607
    %851 = vmatprep.subr.bf16.mxu0 %v610
    %852 = vmatpush1.bf16.msra.mxu0 %v609
    %853 = vmatprep.subr.bf16.mxu0 %v612
    %854 = vmatpush1.bf16.msra.mxu0 %v611
    %855 = vmatprep.subr.bf16.mxu0 %v614
    %856 = vmatpush1.bf16.msra.mxu0 %v613
    %857 = vmatprep.subr.bf16.mxu0 %v616
    %858 = vmatpush1.bf16.msra.mxu0 %v615
    %859 = vmatprep.subr.bf16.mxu0 %v618
    %860 = vmatpush1.bf16.msra.mxu0 %v617
    %861 = vmatprep.subr.bf16.mxu0 %v620
    %862 = vmatpush1.bf16.msra.mxu0 %v619
    %863 = vmatprep.subr.bf16.mxu0 %v622
    %864 = vmatpush1.bf16.msra.mxu0 %v621
    %865 = vmatprep.subr.bf16.mxu0 %v624
    %866 = vmatpush1.bf16.msra.mxu0 %v623
    %867 = vmatprep.subr.bf16.mxu0 %v626
    %868 = vmatpush1.bf16.msra.mxu0 %v625
    %869 = vmatprep.mubr.bf16.mxu0 %v186
    %870 = vmatmul.mubr.bf16.gmra.mrb[0].mxu0 %v185
    %v871 = vpop.f32.mrb[0].mxu0
    %v872 = vadd.f32 %v831, %v871
    %v873 = vpop.f32.mrb[0].mxu0
    %v874 = vadd.f32 %v833, %v873
    %v875 = vpop.f32.mrb[0].mxu0
    %v876 = vpop.f32.mrb[0].mxu0
    %877 = vdwg.mxu0
    %878 = vmatprep.subr.bf16.mxu0 %v628
    %879 = vmatpush1.bf16.msra.mxu0 %v627
    %880 = vmatprep.subr.bf16.mxu0 %v630
    %881 = vmatpush1.bf16.msra.mxu0 %v629
    %882 = vmatprep.subr.bf16.mxu0 %v632
    %883 = vmatpush1.bf16.msra.mxu0 %v631
    %884 = vmatprep.subr.bf16.mxu0 %v634
    %885 = vmatpush1.bf16.msra.mxu0 %v633
    %886 = vmatprep.subr.bf16.mxu0 %v636
    %887 = vmatpush1.bf16.msra.mxu0 %v635
    %888 = vmatprep.subr.bf16.mxu0 %v638
    %889 = vmatpush1.bf16.msra.mxu0 %v637
    %890 = vmatprep.subr.bf16.mxu0 %v640
    %891 = vmatpush1.bf16.msra.mxu0 %v639
    %892 = vmatprep.subr.bf16.mxu0 %v642
    %893 = vmatpush1.bf16.msra.mxu0 %v641
    %894 = vmatprep.subr.bf16.mxu0 0
    %895 = vmatpush1.bf16.msra.mxu0 0
    %896 = vmatprep.subr.bf16.mxu0 0
    %897 = vmatpush1.bf16.msra.mxu0 0
    %898 = vmatprep.subr.bf16.mxu0 0
    %899 = vmatpush1.bf16.msra.mxu0 0
    %900 = vmatprep.subr.bf16.mxu0 0
    %901 = vmatpush1.bf16.msra.mxu0 0
    %902 = vmatprep.subr.bf16.mxu0 0
    %903 = vmatpush1.bf16.msra.mxu0 0
    %904 = vmatprep.subr.bf16.mxu0 0
    %905 = vmatpush1.bf16.msra.mxu0 0
    %906 = vmatprep.subr.bf16.mxu0 0
    %907 = vmatpush1.bf16.msra.mxu0 0
    %908 = vmatprep.subr.bf16.mxu0 0
    %909 = vmatpush1.bf16.msra.mxu0 0
    %910 = vmatprep.mubr.bf16.mxu0 0
    %911 = vmatmul.mubr.bf16.gmra.mrb[0].mxu0 %v187
    %v912 = vpop.f32.mrb[0].mxu0
    %v913 = vadd.f32 %v872, %v912
    %v914 = vpop.f32.mrb[0].mxu0
    %v915 = vadd.f32 %v874, %v914
    %v916 = vpop.f32.mrb[0].mxu0
    %v917 = vpop.f32.mrb[0].mxu0
    %918 = vdwg.mxu0
    %v919 = vmax.f32 %v913, 0.0
    %v920 = vmax.f32 %v915, 0.0
    %v921 = vpack.c.bf16 %v919, %v919
    %v922 = vpack.c.bf16 %v920, %v920
    %v923 = vld [vmem:[%s3] sm:$0xf]
    %v924 = vld [vmem:[%s3 + $0x4] sm:$0xf]
    %v925 = vld [vmem:[%s3 + $0x8] sm:$0xf]
    %v926 = vld [vmem:[%s3 + $0xc] sm:$0xf]
    %v927 = vld [vmem:[%s3 + $0x10] sm:$0xf]
    %v928 = vld [vmem:[%s3 + $0x14] sm:$0xf]
    %v929 = vld [vmem:[%s3 + $0x18] sm:$0xf]
    %v930 = vld [vmem:[%s3 + $0x1c] sm:$0xf]
    %v931 = vld [vmem:[%s3 + $0x20] sm:$0xf]
    %v932 = vld [vmem:[%s3 + $0x24] sm:$0xf]
    %v933 = vld [vmem:[%s3 + $0x28] sm:$0xf]
    %v934 = vld [vmem:[%s3 + $0x2c] sm:$0xf]
    %v935 = vld [vmem:[%s3 + $0x30] sm:$0xf]
    %v936 = vld [vmem:[%s3 + $0x34] sm:$0xf]
    %v937 = vld [vmem:[%s3 + $0x38] sm:$0xf]
    %v938 = vld [vmem:[%s3 + $0x3c] sm:$0xf]
    %v939 = vld [vmem:[%s3 + $0x40] sm:$0xf]
    %v940 = vld [vmem:[%s3 + $0x44] sm:$0xf]
    %v941 = vld [vmem:[%s3 + $0x48] sm:$0xf]
    %v942 = vld [vmem:[%s3 + $0x4c] sm:$0xf]
    %v943 = vld [vmem:[%s3 + $0x50] sm:$0xf]
    %v944 = vld [vmem:[%s3 + $0x54] sm:$0xf]
    %v945 = vld [vmem:[%s3 + $0x58] sm:$0xf]
    %v946 = vld [vmem:[%s3 + $0x5c] sm:$0xf]
    %v947 = vld [vmem:[%s3 + $0x60] sm:$0xf]
    %v948 = vld [vmem:[%s3 + $0x64] sm:$0xf]
    %v949 = vld [vmem:[%s3 + $0x68] sm:$0xf]
    %v950 = vld [vmem:[%s3 + $0x6c] sm:$0xf]
    %v951 = vld [vmem:[%s3 + $0x70] sm:$0xf]
    %v952 = vld [vmem:[%s3 + $0x74] sm:$0xf]
    %v953 = vld [vmem:[%s3 + $0x78] sm:$0xf]
    %v954 = vld [vmem:[%s3 + $0x7c] sm:$0xf]
    %v955 = vld [vmem:[%s4] sm:$0x1]
    %v957 = vlaneseq
    %v958 = vshrl.u32 %v957, 7
    %v959 = vsub.s32 0, %v958
    %v960 = vrot.slane %v955, %v959
    %v994 = vunpack.c.l.b16 %v923
    %v995 = vunpack.c.l.b16 %v924
    %v996 = vunpack.c.l.b16 %v925
    %v997 = vunpack.c.l.b16 %v926
    %v998 = vunpack.c.l.b16 %v927
    %v999 = vunpack.c.l.b16 %v928
    %v1000 = vunpack.c.l.b16 %v929
    %v1001 = vunpack.c.l.b16 %v930
    %v1002 = vunpack.c.l.b16 %v931
    %v1003 = vunpack.c.l.b16 %v932
    %v1004 = vunpack.c.l.b16 %v933
    %v1005 = vunpack.c.l.b16 %v934
    %v1006 = vunpack.c.l.b16 %v935
    %v1007 = vunpack.c.l.b16 %v936
    %v1008 = vunpack.c.l.b16 %v937
    %v1009 = vunpack.c.l.b16 %v938
    %v1010 = vunpack.c.l.b16 %v939
    %v1011 = vunpack.c.l.b16 %v940
    %v1012 = vunpack.c.l.b16 %v941
    %v1013 = vunpack.c.l.b16 %v942
    %v1014 = vunpack.c.l.b16 %v943
    %v1015 = vunpack.c.l.b16 %v944
    %v1016 = vunpack.c.l.b16 %v945
    %v1017 = vunpack.c.l.b16 %v946
    %v1018 = vunpack.c.l.b16 %v947
    %v1019 = vunpack.c.l.b16 %v948
    %v1020 = vunpack.c.l.b16 %v949
    %v1021 = vunpack.c.l.b16 %v950
    %v1022 = vunpack.c.l.b16 %v951
    %v1023 = vunpack.c.l.b16 %v952
    %v1024 = vunpack.c.l.b16 %v953
    %v1025 = vunpack.c.l.b16 %v954
    %v1026 = vpack.c.b16 %v995, %v994
    %v1027 = vpack.c.b16 %v997, %v996
    %v1028 = vpack.c.b16 %v999, %v998
    %v1029 = vpack.c.b16 %v1001, %v1000
    %v1030 = vpack.c.b16 %v1003, %v1002
    %v1031 = vpack.c.b16 %v1005, %v1004
    %v1032 = vpack.c.b16 %v1007, %v1006
    %v1033 = vpack.c.b16 %v1009, %v1008
    %v1034 = vpack.c.b16 %v1011, %v1010
    %v1035 = vpack.c.b16 %v1013, %v1012
    %v1036 = vpack.c.b16 %v1015, %v1014
    %v1037 = vpack.c.b16 %v1017, %v1016
    %v1038 = vpack.c.b16 %v1019, %v1018
    %v1039 = vpack.c.b16 %v1021, %v1020
    %v1040 = vpack.c.b16 %v1023, %v1022
    %v1041 = vpack.c.b16 %v1025, %v1024
    %1058 = vmatprep.subr.bf16.mxu0 0
    %1059 = vmatpush1.bf16.msra.mxu0 %v1026
    %1060 = vmatprep.subr.bf16.mxu0 0
    %1061 = vmatpush1.bf16.msra.mxu0 %v1027
    %1062 = vmatprep.subr.bf16.mxu0 0
    %1063 = vmatpush1.bf16.msra.mxu0 %v1028
    %1064 = vmatprep.subr.bf16.mxu0 0
    %1065 = vmatpush1.bf16.msra.mxu0 %v1029
    %1066 = vmatprep.subr.bf16.mxu0 0
    %1067 = vmatpush1.bf16.msra.mxu0 %v1030
    %1068 = vmatprep.subr.bf16.mxu0 0
    %1069 = vmatpush1.bf16.msra.mxu0 %v1031
    %1070 = vmatprep.subr.bf16.mxu0 0
    %1071 = vmatpush1.bf16.msra.mxu0 %v1032
    %1072 = vmatprep.subr.bf16.mxu0 0
    %1073 = vmatpush1.bf16.msra.mxu0 %v1033
    %1074 = vmatprep.subr.bf16.mxu0 0
    %1075 = vmatpush1.bf16.msra.mxu0 %v1034
    %1076 = vmatprep.subr.bf16.mxu0 0
    %1077 = vmatpush1.bf16.msra.mxu0 %v1035
    %1078 = vmatprep.subr.bf16.mxu0 0
    %1079 = vmatpush1.bf16.msra.mxu0 %v1036
    %1080 = vmatprep.subr.bf16.mxu0 0
    %1081 = vmatpush1.bf16.msra.mxu0 %v1037
    %1082 = vmatprep.subr.bf16.mxu0 0
    %1083 = vmatpush1.bf16.msra.mxu0 %v1038
    %1084 = vmatprep.subr.bf16.mxu0 0
    %1085 = vmatpush1.bf16.msra.mxu0 %v1039
    %1086 = vmatprep.subr.bf16.mxu0 0
    %1087 = vmatpush1.bf16.msra.mxu0 %v1040
    %1088 = vmatprep.subr.bf16.mxu0 0
    %1089 = vmatpush1.bf16.msra.mxu0 %v1041
    %1090 = vmatprep.mubr.bf16.mxu0 %v922
    %1091 = vmatmul.mubr.bf16.gmra.mrb[0].mxu0 %v921
    %v1092 = vpop.f32.mrb[0].mxu0
    %v1093 = vadd.f32 %v960, %v1092
    %v1094 = vpop.f32.mrb[0].mxu0
    %v1095 = vpop.f32.mrb[0].mxu0
    %v1096 = vpop.f32.mrb[0].mxu0
    %1097 = vdwg.mxu0
    %v1098 = vmax.f32 %v1093, 0.0
    %v1099 = vpack.c.bf16 %v1098, %v1098
    %v1100 = vld [vmem:[%s5] sm:$0xf]
    %v1101 = vld [vmem:[%s5 + $0x4] sm:$0xf]
    %v1102 = vld [vmem:[%s5 + $0x8] sm:$0xf]
    %v1103 = vld [vmem:[%s5 + $0xc] sm:$0xf]
    %v1104 = vld [vmem:[%s5 + $0x10] sm:$0xf]
    %v1105 = vld [vmem:[%s5 + $0x14] sm:$0xf]
    %v1106 = vld [vmem:[%s5 + $0x18] sm:$0xf]
    %v1107 = vld [vmem:[%s5 + $0x1c] sm:$0xf]
    %v1108 = vld [vmem:[%s6] sm:$0x1]
    %v1110 = vlaneseq
    %v1111 = vshrl.u32 %v1110, 7
    %v1112 = vsub.s32 0, %v1111
    %v1113 = vrot.slane %v1108, %v1112
    %v1123 = vunpack.c.l.b16 %v1100
    %v1124 = vunpack.c.l.b16 %v1101
    %v1125 = vunpack.c.l.b16 %v1102
    %v1126 = vunpack.c.l.b16 %v1103
    %v1127 = vunpack.c.l.b16 %v1104
    %v1128 = vunpack.c.l.b16 %v1105
    %v1129 = vunpack.c.l.b16 %v1106
    %v1130 = vunpack.c.l.b16 %v1107
    %v1131 = vpack.c.b16 %v1124, %v1123
    %v1132 = vpack.c.b16 %v1126, %v1125
    %v1133 = vpack.c.b16 %v1128, %v1127
    %v1134 = vpack.c.b16 %v1130, %v1129
    %vm1139 = vcmask 523264
    %v1141 = vsel %vm1139, %v1099, 0
    %1143 = vmatprep.subr.bf16.mxu0 0
    %1144 = vmatpush1.bf16.msra.mxu0 %v1131
    %1145 = vmatprep.subr.bf16.mxu0 0
    %1146 = vmatpush1.bf16.msra.mxu0 %v1132
    %1147 = vmatprep.subr.bf16.mxu0 0
    %1148 = vmatpush1.bf16.msra.mxu0 %v1133
    %1149 = vmatprep.subr.bf16.mxu0 0
    %1150 = vmatpush1.bf16.msra.mxu0 %v1134
    %1151 = vmatprep.subr.bf16.mxu0 0
    %1152 = vmatpush1.bf16.msra.mxu0 0
    %1153 = vmatprep.subr.bf16.mxu0 0
    %1154 = vmatpush1.bf16.msra.mxu0 0
    %1155 = vmatprep.subr.bf16.mxu0 0
    %1156 = vmatpush1.bf16.msra.mxu0 0
    %1157 = vmatprep.subr.bf16.mxu0 0
    %1158 = vmatpush1.bf16.msra.mxu0 0
    %1159 = vmatprep.subr.bf16.mxu0 0
    %1160 = vmatpush1.bf16.msra.mxu0 0
    %1161 = vmatprep.subr.bf16.mxu0 0
    %1162 = vmatpush1.bf16.msra.mxu0 0
    %1163 = vmatprep.subr.bf16.mxu0 0
    %1164 = vmatpush1.bf16.msra.mxu0 0
    %1165 = vmatprep.subr.bf16.mxu0 0
    %1166 = vmatpush1.bf16.msra.mxu0 0
    %1167 = vmatprep.subr.bf16.mxu0 0
    %1168 = vmatpush1.bf16.msra.mxu0 0
    %1169 = vmatprep.subr.bf16.mxu0 0
    %1170 = vmatpush1.bf16.msra.mxu0 0
    %1171 = vmatprep.subr.bf16.mxu0 0
    %1172 = vmatpush1.bf16.msra.mxu0 0
    %1173 = vmatprep.subr.bf16.mxu0 0
    %1174 = vmatpush1.bf16.msra.mxu0 0
    %1175 = vmatprep.mubr.bf16.mxu0 0
    %1176 = vmatmul.mubr.bf16.gmra.mrb[0].mxu0 %v1141
    %v1177 = vpop.f32.mrb[0].mxu0
    %v1178 = vadd.f32 %v1113, %v1177
    %v1179 = vpop.f32.mrb[0].mxu0
    %v1180 = vpop.f32.mrb[0].mxu0
    %v1181 = vpop.f32.mrb[0].mxu0
    %1182 = vdwg.mxu0
    %1183 = vst [vmem:[#allocation5] sm:$0xff] %v1178
    // Predicated region
    $region34: #{tpu_custom_call.1} parent=1 // pred_check
      _
    $region35: #{tpu_custom_call.1} parent=1 // pred_check_branch
      %1185 = sbr.rel (0) target = $region37
    $region36: #{tpu_custom_call.1} parent=1 // pred_region
      %s1187 = ssub.s32 128, 128
      %1188 = vsyncadd [#allocation4], %s1187
      %s1190 = sshll.u32 [#allocation5], 4
      %s1191 = int_to_ptr.vmem [resolvable:$true] %s1190
      %1193 = dma.vmem_to_hbm [thread:$0]  %s1191, 128, %s7, [#allocation4]
    $region37: #{tpu_custom_call.1} parent=1 // pred_fallthru
      _
    // Predicated region
    $region38: #{tpu_custom_call.1} parent=1 // pred_check
      _
    $region39: #{tpu_custom_call.1} parent=1 // pred_check_branch
      %1195 = sbr.rel (0) target = $region41
    $region40: #{tpu_custom_call.1} parent=1 // pred_region
      %1196 = dma.done [#allocation4], 128
    $region41: #{tpu_custom_call.1} parent=1 // pred_fallthru
      _
    %1197 = vsyncpa [#allocation3], 1
    %1198 = vsyncpa [#allocation4], 1

</llo_original>
